<compile_context>
chip_gen: v7x
topology: tpu7x:2x2x1
jax: 0.10.0
libtpu: 0.0.40
codegen_flags: <defaults>
</compile_context>

<pallas_src>
import functools

import jax
import jax.numpy as jnp
from jax.experimental import pallas as pl
from jax.experimental.pallas import tpu as pltpu


def _round_up(x, m):
    return (x + m - 1) // m * m


# ----------------------------- Pallas kernel ------------------------------ #
def _resblock_kernel(x_ref, w1_ref, w2_ref, g1_ref, b1_ref, g2_ref, b2_ref,
                     o_ref, *, n_rows, seg_len, use_residual):
    """All repeats of the ResidualBlock, one repeat per grid step.

    Shapes (already lane-padded):
      x_ref/o_ref : (n_rows, Cp)       f32   (n_rows = N*L, channels-last)
      w1_ref      : (Cp, Cmid_p)       bf16  (1x1 conv)
      w2_ref      : (3, Cmid_p, Cp)    bf16  (k=3 conv taps)
      g*/b*       : (1, Cmid_p)/(1,Cp) f32   (BN affine)
    """
    r = pl.program_id(0)

    # Initialize the VMEM-resident carry from the input on the first repeat.
    @pl.when(r == 0)
    def _():
        o_ref[...] = x_ref[...]

    x = o_ref[...]                                   # (n_rows, Cp) f32 carry
    inv_rows = 1.0 / n_rows                          # static

    def bn_leaky(t, gamma, beta):
        # Training-mode BatchNorm1d: batch stats over the row (N*L) axis,
        # biased variance, eps=1e-5 — single pass (E[x], E[x^2]), all in f32.
        mean = jnp.sum(t, axis=0, keepdims=True) * inv_rows
        meansq = jnp.sum(t * t, axis=0, keepdims=True) * inv_rows
        var = meansq - mean * mean
        t = (t - mean) * jax.lax.rsqrt(var + 1e-5)
        t = t * gamma + beta
        return jnp.maximum(t, 0.1 * t)               # LeakyReLU(0.1)

    # ---- Conv1d(C -> C/2, k=1): one full-width bf16 matmul on the MXU ----
    h = jnp.dot(x.astype(jnp.bfloat16), w1_ref[...],
                preferred_element_type=jnp.float32)  # (n_rows, Cmid_p) f32
    h = bn_leaky(h, g1_ref[...], b1_ref[...])

    # ---- Conv1d(C/2 -> C, k=3, pad=1): 3 full-width matmuls ----
    # Row index within each length-L segment (per-sample position).
    l_idx = jax.lax.broadcasted_iota(jnp.int32, h.shape, 0) % seg_len
    # "previous" tap: row i sees h[i-1]; zero the first row of each segment.
    h_prev = jnp.where(l_idx == 0, 0.0,
                       pltpu.roll(h, 1, 0)).astype(jnp.bfloat16)
    # "next" tap: row i sees h[i+1]; zero the last row of each segment.
    h_next = jnp.where(l_idx == seg_len - 1, 0.0,
                       pltpu.roll(h, n_rows - 1, 0)).astype(jnp.bfloat16)
    h_mid = h.astype(jnp.bfloat16)

    y = jnp.dot(h_mid, w2_ref[1], preferred_element_type=jnp.float32)
    y = y + jnp.dot(h_prev, w2_ref[0], preferred_element_type=jnp.float32)
    y = y + jnp.dot(h_next, w2_ref[2], preferred_element_type=jnp.float32)

    y = bn_leaky(y, g2_ref[...], b2_ref[...])

    o_ref[...] = (y + x) if use_residual else y


# ------------------------------- wrapper ----------------------------------- #
def residual_block_forward(x_ncl, params, use_residual=True):
    """x_ncl: (N, C, L) float32, PyTorch NCL layout.

    params: list of (w1, w2, g1, b1, g2, b2) per repeat with
      w1: (C, C/2)      = torch conv1 weight[:, :, 0].T
      w2: (3, C/2, C)   = torch conv2 weight transposed to (k, c_in, c_out)
      g1,b1: (1, C/2)   g2,b2: (1, C)   BatchNorm affine params.
    """
    N, C, L = x_ncl.shape
    R = len(params)
    Cmid = params[0][0].shape[1]
    rows = N * L
    # TODO(synk): support N*L not a multiple of 8 via row padding + a
    # row-validity mask in the BN reductions.
    assert rows % 8 == 0, "N*L must be a multiple of 8"

    Cp = _round_up(C, 128)
    Cmid_p = _round_up(Cmid, 128)

    # channels-last, flattened, lane-padded input (f32).
    x2 = jnp.transpose(x_ncl, (0, 2, 1)).reshape(rows, C)
    x2p = jnp.pad(x2, ((0, 0), (0, Cp - C))).astype(jnp.float32)

    # Stack per-repeat parameters along a leading repeat axis; zero-pad the
    # channel axes (padded channels stay exactly zero through the whole block).
    w1_l, w2_l, g1_l, b1_l, g2_l, b2_l = [], [], [], [], [], []
    for (w1, w2, g1, b1, g2, b2) in params:
        w1_l.append(jnp.pad(w1, ((0, Cp - C), (0, Cmid_p - Cmid))))
        w2_l.append(jnp.pad(w2, ((0, 0), (0, Cmid_p - Cmid), (0, Cp - C))))
        g1_l.append(jnp.pad(g1, ((0, 0), (0, Cmid_p - Cmid)), constant_values=1.0))
        b1_l.append(jnp.pad(b1, ((0, 0), (0, Cmid_p - Cmid))))
        g2_l.append(jnp.pad(g2, ((0, 0), (0, Cp - C)), constant_values=1.0))
        b2_l.append(jnp.pad(b2, ((0, 0), (0, Cp - C))))
    w1s = jnp.stack(w1_l).astype(jnp.bfloat16)   # (R, Cp, Cmid_p)
    w2s = jnp.stack(w2_l).astype(jnp.bfloat16)   # (R, 3, Cmid_p, Cp)
    g1s = jnp.stack(g1_l).astype(jnp.float32)    # (R, 1, Cmid_p)
    b1s = jnp.stack(b1_l).astype(jnp.float32)
    g2s = jnp.stack(g2_l).astype(jnp.float32)    # (R, 1, Cp)
    b2s = jnp.stack(b2_l).astype(jnp.float32)

    kernel = functools.partial(_resblock_kernel, n_rows=rows, seg_len=L,
                               use_residual=use_residual)

    out2p = pl.pallas_call(
        kernel,
        out_shape=jax.ShapeDtypeStruct((rows, Cp), jnp.float32),
        grid=(R,),
        in_specs=[
            pl.BlockSpec((rows, Cp), lambda r: (0, 0)),            # x (fetched once)
            pl.BlockSpec((None, Cp, Cmid_p), lambda r: (r, 0, 0)),   # w1[r]
            pl.BlockSpec((None, 3, Cmid_p, Cp), lambda r: (r, 0, 0, 0)),  # w2[r]
            pl.BlockSpec((None, 1, Cmid_p), lambda r: (r, 0, 0)),    # g1[r]
            pl.BlockSpec((None, 1, Cmid_p), lambda r: (r, 0, 0)),    # b1[r]
            pl.BlockSpec((None, 1, Cp), lambda r: (r, 0, 0)),        # g2[r]
            pl.BlockSpec((None, 1, Cp), lambda r: (r, 0, 0)),        # b2[r]
        ],
        out_specs=pl.BlockSpec((rows, Cp), lambda r: (0, 0)),
        input_output_aliases={0: 0},     # x2p is dead after the call
        compiler_params=pltpu.CompilerParams(
            dimension_semantics=("arbitrary",),   # repeats are sequential
            vmem_limit_bytes=32 * 1024 * 1024),
    )(x2p, w1s, w2s, g1s, b1s, g2s, b2s)

    out2 = out2p[:, :C]
    return jnp.transpose(out2.reshape(N, L, C), (0, 2, 1))     # back to NCL


# --------------------------- pure-JAX reference ---------------------------- #
def _ref_bn_leaky(t, gamma, beta):           # t: (N, C, L); gamma/beta: (1, C)
    mu = jnp.mean(t, axis=(0, 2), keepdims=True)
    var = jnp.mean((t - mu) ** 2, axis=(0, 2), keepdims=True)  # biased variance
    t = (t - mu) * jax.lax.rsqrt(var + 1e-5)
    t = t * gamma[0][None, :, None] + beta[0][None, :, None]
    return jnp.where(t > 0, t, 0.1 * t)


def ref_forward(x_ncl, params, use_residual=True):
    x = x_ncl
    L = x.shape[2]
    for (w1, w2, g1, b1, g2, b2) in params:
        h = jnp.einsum('ncl,cm->nml', x, w1)                       # 1x1 conv
        h = _ref_bn_leaky(h, g1, b1)
        hp = jnp.pad(h, ((0, 0), (0, 0), (1, 1)))                  # pad=1
        y = sum(jnp.einsum('nml,mc->ncl', hp[:, :, k:k + L], w2[k])
                for k in range(3))                                 # k=3 conv
        y = _ref_bn_leaky(y, g2, b2)
        x = y + x if use_residual else y
    return x


# ---------------------------------- main ----------------------------------- #
if __name__ == "__main__":
    N, C, L = 2, 8, 16          # batch, channels, length (channels must be even)
    num_repeats = 2
    Cmid = C // 2

    key = jax.random.PRNGKey(0)
    params = []
    for _ in range(num_repeats):
        key, k1, k2 = jax.random.split(key, 3)
        # Conv1d(C, Cmid, k=1) weight, stored as (C, Cmid)  [= torch W[:, :, 0].T]
        w1 = jax.random.normal(k1, (C, Cmid), jnp.float32) * (1.0 / jnp.sqrt(C))
        # Conv1d(Cmid, C, k=3) weight, stored as (3, Cmid, C) [= torch W.transpose(2,1,0)]
        w2 = jax.random.normal(k2, (3, Cmid, C), jnp.float32) * (1.0 / jnp.sqrt(3 * Cmid))
        # BatchNorm1d affine params at PyTorch init (gamma=1, beta=0)
        g1 = jnp.ones((1, Cmid), jnp.float32)
        b1 = jnp.zeros((1, Cmid), jnp.float32)
        g2 = jnp.ones((1, C), jnp.float32)
        b2 = jnp.zeros((1, C), jnp.float32)
        params.append((w1, w2, g1, b1, g2, b2))

    key, kx = jax.random.split(key)
    x = jax.random.normal(kx, (N, C, L), jnp.float32)          # NCL like PyTorch

    out = residual_block_forward(x, params, use_residual=True)
    out = jax.block_until_ready(out)

    ref = ref_forward(x, params, use_residual=True)
    assert out.shape == ref.shape == (N, C, L)
    # bf16 MXU operands vs f32 reference -> slightly looser tolerance.
    max_err = float(jnp.max(jnp.abs(out - ref)))
    assert jnp.allclose(out, ref, rtol=5e-2, atol=5e-2), (
        f"mismatch vs reference (max abs err {max_err})")

    # TODO(synk): BatchNorm running-statistics updates (training bookkeeping,
    # no effect on the forward output) are not modeled.
    print("KERNEL_OK")
</pallas_src>

<mosaic_0001>
module attributes {stable_mosaic.version = 11 : i64} {
  func.func @_resblock_kernel(%arg0: i32, %arg1: memref<32x128xf32, #tpu.memory_space<vmem>>, %arg2: memref<1x128x128xbf16, #tpu.memory_space<vmem>>, %arg3: memref<1x3x128x128xbf16, #tpu.memory_space<vmem>>, %arg4: memref<1x1x128xf32, #tpu.memory_space<vmem>>, %arg5: memref<1x1x128xf32, #tpu.memory_space<vmem>>, %arg6: memref<1x1x128xf32, #tpu.memory_space<vmem>>, %arg7: memref<1x1x128xf32, #tpu.memory_space<vmem>>, %arg8: memref<32x128xf32, #tpu.memory_space<vmem>>) attributes {dimension_semantics = [#tpu.dimension_semantics<arbitrary>], iteration_bounds = array<i64: 2>, scalar_prefetch = 0 : i64, scratch_operands = 0 : i64, tpu.core_type = #tpu.core_type<tc>, window_params = [{pipeline_mode = #tpu.pipeline_mode<synchronous>, transform_indices = @transform_0, window_bounds = array<i64: 32, 128>}, {transform_indices = @transform_1, window_bounds = array<i64: 1, 128, 128>}, {transform_indices = @transform_2, window_bounds = array<i64: 1, 3, 128, 128>}, {transform_indices = @transform_3, window_bounds = array<i64: 1, 1, 128>}, {transform_indices = @transform_4, window_bounds = array<i64: 1, 1, 128>}, {transform_indices = @transform_5, window_bounds = array<i64: 1, 1, 128>}, {transform_indices = @transform_6, window_bounds = array<i64: 1, 1, 128>}, {pipeline_mode = #tpu.pipeline_mode<synchronous>, transform_indices = @transform_7, window_bounds = array<i64: 32, 128>}]} {
    %c0_i32 = arith.constant 0 : i32
    %0 = arith.cmpi eq, %arg0, %c0_i32 : i32
    %1 = arith.extui %0 : i1 to i32
    %c0_i32_0 = arith.constant 0 : i32
    %2 = arith.cmpi ne, %1, %c0_i32_0 : i32
    scf.if %2 {
      %c0_52 = arith.constant 0 : index
      %c0_53 = arith.constant 0 : index
      %109 = vector.load %arg1[%c0_52, %c0_53] : memref<32x128xf32, #tpu.memory_space<vmem>>, vector<32x128xf32>
      %c0_54 = arith.constant 0 : index
      %c0_55 = arith.constant 0 : index
      %110 = vector.load %arg8[%c0_54, %c0_55] : memref<32x128xf32, #tpu.memory_space<vmem>>, vector<32x128xf32>
      tpu.vector_store %arg8[%c0_54, %c0_55], %109 {strides = array<i32>} : memref<32x128xf32, #tpu.memory_space<vmem>>, vector<32x128xf32>,
    } else {
    }
    %c0 = arith.constant 0 : index
    %c0_1 = arith.constant 0 : index
    %3 = vector.load %arg8[%c0, %c0_1] : memref<32x128xf32, #tpu.memory_space<vmem>>, vector<32x128xf32>
    %4 = arith.truncf %3 : vector<32x128xf32> to vector<32x128xbf16>
    %c0_2 = arith.constant 0 : index
    %c0_3 = arith.constant 0 : index
    %c0_4 = arith.constant 0 : index
    %5 = vector.load %arg2[%c0_2, %c0_3, %c0_4] : memref<1x128x128xbf16, #tpu.memory_space<vmem>>, vector<1x128x128xbf16>
    %6 = vector.shape_cast %5 : vector<1x128x128xbf16> to vector<128x128xbf16>
    %cst = arith.constant dense<0.000000e+00> : vector<32x128xf32>
    %7 = tpu.matmul %4, %6, %cst {dimension_numbers = #tpu.dot_dimension_numbers<[1], [0], [0], [1], [0, 0, 1, 1], [], []>} : vector<32x128xbf16>, vector<128x128xbf16>, vector<32x128xf32> -> vector<32x128xf32>
    %c0_5 = arith.constant 0 : index
    %c0_6 = arith.constant 0 : index
    %c0_7 = arith.constant 0 : index
    %8 = vector.load %arg4[%c0_5, %c0_6, %c0_7] : memref<1x1x128xf32, #tpu.memory_space<vmem>>, vector<1x1x128xf32>
    %9 = vector.shape_cast %8 : vector<1x1x128xf32> to vector<1x128xf32>
    %c0_8 = arith.constant 0 : index
    %c0_9 = arith.constant 0 : index
    %c0_10 = arith.constant 0 : index
    %10 = vector.load %arg5[%c0_8, %c0_9, %c0_10] : memref<1x1x128xf32, #tpu.memory_space<vmem>>, vector<1x1x128xf32>
    %11 = vector.shape_cast %10 : vector<1x1x128xf32> to vector<1x128xf32>
    %cst_11 = arith.constant dense<0.000000e+00> : vector<128xf32>
    %12 = vector.multi_reduction <add>, %7, %cst_11 [0] : vector<32x128xf32> to vector<128xf32>
    %13 = vector.shape_cast %12 : vector<128xf32> to vector<1x128xf32>
    %cst_12 = arith.constant 3.125000e-02 : f32
    %14 = vector.broadcast %cst_12 : f32 to vector<1x128xf32>
    %15 = arith.mulf %13, %14 : vector<1x128xf32>
    %16 = arith.mulf %7, %7 : vector<32x128xf32>
    %cst_13 = arith.constant dense<0.000000e+00> : vector<128xf32>
    %17 = vector.multi_reduction <add>, %16, %cst_13 [0] : vector<32x128xf32> to vector<128xf32>
    %18 = vector.shape_cast %17 : vector<128xf32> to vector<1x128xf32>
    %cst_14 = arith.constant 3.125000e-02 : f32
    %19 = vector.broadcast %cst_14 : f32 to vector<1x128xf32>
    %20 = arith.mulf %18, %19 : vector<1x128xf32>
    %21 = arith.mulf %15, %15 : vector<1x128xf32>
    %22 = arith.subf %20, %21 : vector<1x128xf32>
    %23 = vector.broadcast %15 : vector<1x128xf32> to vector<32x128xf32>
    %24 = arith.subf %7, %23 : vector<32x128xf32>
    %cst_15 = arith.constant 9.99999974E-6 : f32
    %25 = vector.broadcast %cst_15 : f32 to vector<1x128xf32>
    %26 = arith.addf %22, %25 : vector<1x128xf32>
    %27 = math.rsqrt %26 : vector<1x128xf32>
    %28 = vector.broadcast %27 : vector<1x128xf32> to vector<32x128xf32>
    %29 = arith.mulf %24, %28 : vector<32x128xf32>
    %30 = vector.broadcast %9 : vector<1x128xf32> to vector<32x128xf32>
    %31 = arith.mulf %29, %30 : vector<32x128xf32>
    %32 = vector.broadcast %11 : vector<1x128xf32> to vector<32x128xf32>
    %33 = arith.addf %31, %32 : vector<32x128xf32>
    %cst_16 = arith.constant 1.000000e-01 : f32
    %34 = vector.broadcast %cst_16 : f32 to vector<32x128xf32>
    %35 = arith.mulf %34, %33 : vector<32x128xf32>
    %36 = arith.maximumf %33, %35 : vector<32x128xf32>
    %37 = tpu.iota {dimensions = array<i32: 0>} : vector<32x128xi32>
    %c16_i32 = arith.constant 16 : i32
    %c0_i32_17 = arith.constant 0 : i32
    %38 = arith.cmpi eq, %c16_i32, %c0_i32_17 : i32
    %c1_i32 = arith.constant 1 : i32
    %39 = arith.select %38, %c1_i32, %c16_i32 : i32
    %40 = vector.broadcast %39 : i32 to vector<32x128xi32>
    %41 = arith.remsi %37, %40 : vector<32x128xi32>
    %c0_i32_18 = arith.constant 0 : i32
    %42 = vector.broadcast %c0_i32_18 : i32 to vector<32x128xi32>
    %43 = arith.cmpi ne, %41, %42 : vector<32x128xi32>
    %c0_i32_19 = arith.constant 0 : i32
    %44 = vector.broadcast %c0_i32_19 : i32 to vector<32x128xi32>
    %45 = arith.cmpi slt, %41, %44 : vector<32x128xi32>
    %c0_i32_20 = arith.constant 0 : i32
    %46 = arith.cmpi slt, %39, %c0_i32_20 : i32
    %47 = vector.broadcast %46 : i1 to vector<32x128xi1>
    %48 = vector.broadcast %47 : vector<32x128xi1> to vector<32x128xi1>
    %49 = arith.xori %45, %48 : vector<32x128xi1>
    %50 = arith.andi %49, %43 : vector<32x128xi1>
    %51 = vector.broadcast %39 : i32 to vector<32x128xi32>
    %52 = arith.addi %41, %51 : vector<32x128xi32>
    %53 = arith.select %50, %52, %41 : vector<32x128xi1>, vector<32x128xi32>
    %c0_i32_21 = arith.constant 0 : i32
    %54 = vector.broadcast %c0_i32_21 : i32 to vector<32x128xi32>
    %55 = arith.cmpi eq, %53, %54 : vector<32x128xi32>
    %c1_i32_22 = arith.constant 1 : i32
    %56 = tpu.dynamic_rotate %36 by %c1_i32_22 dim 0 : vector<32x128xf32>, i32 -> vector<32x128xf32>
    %cst_23 = arith.constant 0.000000e+00 : f32
    %57 = vector.broadcast %cst_23 : f32 to vector<32x128xf32>
    %58 = arith.select %55, %57, %56 : vector<32x128xi1>, vector<32x128xf32>
    %59 = arith.truncf %58 : vector<32x128xf32> to vector<32x128xbf16>
    %c15_i32 = arith.constant 15 : i32
    %60 = vector.broadcast %c15_i32 : i32 to vector<32x128xi32>
    %61 = arith.cmpi eq, %53, %60 : vector<32x128xi32>
    %c31_i32 = arith.constant 31 : i32
    %62 = tpu.dynamic_rotate %36 by %c31_i32 dim 0 : vector<32x128xf32>, i32 -> vector<32x128xf32>
    %cst_24 = arith.constant 0.000000e+00 : f32
    %63 = vector.broadcast %cst_24 : f32 to vector<32x128xf32>
    %64 = arith.select %61, %63, %62 : vector<32x128xi1>, vector<32x128xf32>
    %65 = arith.truncf %64 : vector<32x128xf32> to vector<32x128xbf16>
    %66 = arith.truncf %36 : vector<32x128xf32> to vector<32x128xbf16>
    %c0_25 = arith.constant 0 : index
    %c1 = arith.constant 1 : index
    %c0_26 = arith.constant 0 : index
    %c0_27 = arith.constant 0 : index
    %67 = vector.load %arg3[%c0_25, %c1, %c0_26, %c0_27] : memref<1x3x128x128xbf16, #tpu.memory_space<vmem>>, vector<1x1x128x128xbf16>
    %68 = vector.shape_cast %67 : vector<1x1x128x128xbf16> to vector<128x128xbf16>
    %cst_28 = arith.constant dense<0.000000e+00> : vector<32x128xf32>
    %69 = tpu.matmul %66, %68, %cst_28 {dimension_numbers = #tpu.dot_dimension_numbers<[1], [0], [0], [1], [0, 0, 1, 1], [], []>} : vector<32x128xbf16>, vector<128x128xbf16>, vector<32x128xf32> -> vector<32x128xf32>
    %c0_29 = arith.constant 0 : index
    %c0_30 = arith.constant 0 : index
    %c0_31 = arith.constant 0 : index
    %c0_32 = arith.constant 0 : index
    %70 = vector.load %arg3[%c0_29, %c0_30, %c0_31, %c0_32] : memref<1x3x128x128xbf16, #tpu.memory_space<vmem>>, vector<1x1x128x128xbf16>
    %71 = vector.shape_cast %70 : vector<1x1x128x128xbf16> to vector<128x128xbf16>
    %cst_33 = arith.constant dense<0.000000e+00> : vector<32x128xf32>
    %72 = tpu.matmul %59, %71, %cst_33 {dimension_numbers = #tpu.dot_dimension_numbers<[1], [0], [0], [1], [0, 0, 1, 1], [], []>} : vector<32x128xbf16>, vector<128x128xbf16>, vector<32x128xf32> -> vector<32x128xf32>
    %73 = arith.addf %69, %72 : vector<32x128xf32>
    %c0_34 = arith.constant 0 : index
    %c2 = arith.constant 2 : index
    %c0_35 = arith.constant 0 : index
    %c0_36 = arith.constant 0 : index
    %74 = vector.load %arg3[%c0_34, %c2, %c0_35, %c0_36] : memref<1x3x128x128xbf16, #tpu.memory_space<vmem>>, vector<1x1x128x128xbf16>
    %75 = vector.shape_cast %74 : vector<1x1x128x128xbf16> to vector<128x128xbf16>
    %cst_37 = arith.constant dense<0.000000e+00> : vector<32x128xf32>
    %76 = tpu.matmul %65, %75, %cst_37 {dimension_numbers = #tpu.dot_dimension_numbers<[1], [0], [0], [1], [0, 0, 1, 1], [], []>} : vector<32x128xbf16>, vector<128x128xbf16>, vector<32x128xf32> -> vector<32x128xf32>
    %77 = arith.addf %73, %76 : vector<32x128xf32>
    %c0_38 = arith.constant 0 : index
    %c0_39 = arith.constant 0 : index
    %c0_40 = arith.constant 0 : index
    %78 = vector.load %arg6[%c0_38, %c0_39, %c0_40] : memref<1x1x128xf32, #tpu.memory_space<vmem>>, vector<1x1x128xf32>
    %79 = vector.shape_cast %78 : vector<1x1x128xf32> to vector<1x128xf32>
    %c0_41 = arith.constant 0 : index
    %c0_42 = arith.constant 0 : index
    %c0_43 = arith.constant 0 : index
    %80 = vector.load %arg7[%c0_41, %c0_42, %c0_43] : memref<1x1x128xf32, #tpu.memory_space<vmem>>, vector<1x1x128xf32>
    %81 = vector.shape_cast %80 : vector<1x1x128xf32> to vector<1x128xf32>
    %cst_44 = arith.constant dense<0.000000e+00> : vector<128xf32>
    %82 = vector.multi_reduction <add>, %77, %cst_44 [0] : vector<32x128xf32> to vector<128xf32>
    %83 = vector.shape_cast %82 : vector<128xf32> to vector<1x128xf32>
    %cst_45 = arith.constant 3.125000e-02 : f32
    %84 = vector.broadcast %cst_45 : f32 to vector<1x128xf32>
    %85 = arith.mulf %83, %84 : vector<1x128xf32>
    %86 = arith.mulf %77, %77 : vector<32x128xf32>
    %cst_46 = arith.constant dense<0.000000e+00> : vector<128xf32>
    %87 = vector.multi_reduction <add>, %86, %cst_46 [0] : vector<32x128xf32> to vector<128xf32>
    %88 = vector.shape_cast %87 : vector<128xf32> to vector<1x128xf32>
    %cst_47 = arith.constant 3.125000e-02 : f32
    %89 = vector.broadcast %cst_47 : f32 to vector<1x128xf32>
    %90 = arith.mulf %88, %89 : vector<1x128xf32>
    %91 = arith.mulf %85, %85 : vector<1x128xf32>
    %92 = arith.subf %90, %91 : vector<1x128xf32>
    %93 = vector.broadcast %85 : vector<1x128xf32> to vector<32x128xf32>
    %94 = arith.subf %77, %93 : vector<32x128xf32>
    %cst_48 = arith.constant 9.99999974E-6 : f32
    %95 = vector.broadcast %cst_48 : f32 to vector<1x128xf32>
    %96 = arith.addf %92, %95 : vector<1x128xf32>
    %97 = math.rsqrt %96 : vector<1x128xf32>
    %98 = vector.broadcast %97 : vector<1x128xf32> to vector<32x128xf32>
    %99 = arith.mulf %94, %98 : vector<32x128xf32>
    %100 = vector.broadcast %79 : vector<1x128xf32> to vector<32x128xf32>
    %101 = arith.mulf %99, %100 : vector<32x128xf32>
    %102 = vector.broadcast %81 : vector<1x128xf32> to vector<32x128xf32>
    %103 = arith.addf %101, %102 : vector<32x128xf32>
    %cst_49 = arith.constant 1.000000e-01 : f32
    %104 = vector.broadcast %cst_49 : f32 to vector<32x128xf32>
    %105 = arith.mulf %104, %103 : vector<32x128xf32>
    %106 = arith.maximumf %103, %105 : vector<32x128xf32>
    %107 = arith.addf %106, %3 : vector<32x128xf32>
    %c0_50 = arith.constant 0 : index
    %c0_51 = arith.constant 0 : index
    %108 = vector.load %arg8[%c0_50, %c0_51] : memref<32x128xf32, #tpu.memory_space<vmem>>, vector<32x128xf32>
    tpu.vector_store %arg8[%c0_50, %c0_51], %107 {strides = array<i32>} : memref<32x128xf32, #tpu.memory_space<vmem>>, vector<32x128xf32>,
    return
  }
  func.func @transform_0(%arg0: i32) -> (i32, i32) {
    %c0_i32 = arith.constant 0 : i32
    %c0_i32_0 = arith.constant 0 : i32
    %c0_i32_1 = arith.constant 0 : i32
    return %c0_i32, %c0_i32_0 : i32, i32
  }
  func.func @transform_1(%arg0: i32) -> (i32, i32, i32) {
    %c0_i32 = arith.constant 0 : i32
    %c0_i32_0 = arith.constant 0 : i32
    %c0_i32_1 = arith.constant 0 : i32
    return %arg0, %c0_i32, %c0_i32_0 : i32, i32, i32
  }
  func.func @transform_2(%arg0: i32) -> (i32, i32, i32, i32) {
    %c0_i32 = arith.constant 0 : i32
    %c0_i32_0 = arith.constant 0 : i32
    %c0_i32_1 = arith.constant 0 : i32
    %c0_i32_2 = arith.constant 0 : i32
    return %arg0, %c0_i32, %c0_i32_0, %c0_i32_1 : i32, i32, i32, i32
  }
  func.func @transform_3(%arg0: i32) -> (i32, i32, i32) {
    %c0_i32 = arith.constant 0 : i32
    %c0_i32_0 = arith.constant 0 : i32
    %c0_i32_1 = arith.constant 0 : i32
    return %arg0, %c0_i32, %c0_i32_0 : i32, i32, i32
  }
  func.func @transform_4(%arg0: i32) -> (i32, i32, i32) {
    %c0_i32 = arith.constant 0 : i32
    %c0_i32_0 = arith.constant 0 : i32
    %c0_i32_1 = arith.constant 0 : i32
    return %arg0, %c0_i32, %c0_i32_0 : i32, i32, i32
  }
  func.func @transform_5(%arg0: i32) -> (i32, i32, i32) {
    %c0_i32 = arith.constant 0 : i32
    %c0_i32_0 = arith.constant 0 : i32
    %c0_i32_1 = arith.constant 0 : i32
    return %arg0, %c0_i32, %c0_i32_0 : i32, i32, i32
  }
  func.func @transform_6(%arg0: i32) -> (i32, i32, i32) {
    %c0_i32 = arith.constant 0 : i32
    %c0_i32_0 = arith.constant 0 : i32
    %c0_i32_1 = arith.constant 0 : i32
    return %arg0, %c0_i32, %c0_i32_0 : i32, i32, i32
  }
  func.func @transform_7(%arg0: i32) -> (i32, i32) {
    %c0_i32 = arith.constant 0 : i32
    %c0_i32_0 = arith.constant 0 : i32
    %c0_i32_1 = arith.constant 0 : i32
    return %c0_i32, %c0_i32_0 : i32, i32
  }
}

</mosaic_0001>

<llo_original>
// kernel: tpu_custom_call.1
$region0: #{tpu_custom_call.1}
  #allocation0 [shape = 'u32[]', space=smem, size = 0x4, offset = 0x4, fixed_abs, tag = 'smem constant byte address 0x4 - core index']
  #allocation1 [shape = 'u32[144,128]{1,0:T(1,128)}', space=vmem, size = 0x12000, scoped, tag = 'internal scratch']
  %s0 = inlined_call_operand.hbm [shape: f32[32,128], index: 0, kind: input, shape index: {}, may-alias: {0,7}]
  %s1 = inlined_call_operand.hbm [shape: bf16[2,128,128], index: 1, kind: input, shape index: {}]
  %s2 = inlined_call_operand.hbm [shape: bf16[2,3,128,128], index: 2, kind: input, shape index: {}]
  %s3 = inlined_call_operand.vmem [shape: f32[2,1,128], index: 3, kind: input, shape index: {}]
  %s4 = inlined_call_operand.vmem [shape: f32[2,1,128], index: 4, kind: input, shape index: {}]
  %s5 = inlined_call_operand.vmem [shape: f32[2,1,128], index: 5, kind: input, shape index: {}]
  %s6 = inlined_call_operand.vmem [shape: f32[2,1,128], index: 6, kind: input, shape index: {}]
  %s7 = inlined_call_operand.hbm [shape: f32[32,128], index: 7, kind: output, shape index: {}, may-alias: {0,7}]
  %s8 = sld [smem:[#allocation0]]
  $region77: #{tpu_custom_call.1} parent=0
    _
  %s10 = ssub.s32 1, %s8
  %s11 = scalar_select 0, %s10, %s8
  $region1: #{tpu_custom_call.1} parent=0
    #allocation2 [shape = 'u8[16384]{0}', space=vmem, size = 0x4000, scoped, tag = 'input window, operand 0, single buffered']
    #allocation3 [shape = 's32[2]{0}', space=sflag, size = 0x8, scoped, tag = 'scoped memory for tpu_custom_call.1']
    #allocation4 [shape = 's32[2]{0}', space=sflag, size = 0x8, scoped, tag = 'scoped memory for tpu_custom_call.1']
    #allocation5 [shape = 'u8[65536]{0}', space=vmem, size = 0x10000, scoped, tag = 'input window, operand 1']
    #allocation6 [shape = 's32[2]{0}', space=sflag, size = 0x8, scoped, tag = 'scoped memory for tpu_custom_call.1']
    #allocation7 [shape = 'u8[196608]{0}', space=vmem, size = 0x30000, scoped, tag = 'input window, operand 2']
    #allocation8 [shape = 'u8[16384]{0}', space=vmem, size = 0x4000, scoped, tag = 'output window, operand 0, single buffered']
    %12 = vsyncpa [#allocation3], 0
    %13 = vsyncpa [#allocation6], 0
    %s14 = scalar_lea.sflag [#allocation6], 1
    %15 = vsyncpa %s14, 0
    %16 = vsyncpa [#allocation4], 0
    loop: start=0, step=1, limit=4
    $region2: #{tpu_custom_call.1} parent=1 // loop_pre_header
      _
    $region3: #{tpu_custom_call.1} parent=1 // loop_header
      %s18 = sphi 0, %s22
      %p19 = scmp.ge.s32.totalorder %s18, 4
      %s26 = sphi 0, %s26
      %s28 = sphi 0, %s26
      %s29 = sphi 0, %s28
      %s43 = sphi 0, %s29
      %s49 = sphi 0, %s51
      %s52 = sphi 0, %s49
      %s53 = sphi 0, %s52
      %s69 = sphi 0, %s53
      %s75 = sphi 0, %s77
      %s78 = sphi 0, %s75
      %s79 = sphi 0, %s78
      %s95 = sphi 0, %s79
      %s101 = sphi 0, %s103
      %s104 = sphi 0, %s101
      %s105 = sphi 0, %s104
      %s121 = sphi 0, %s105
      %s127 = sphi 0, %s129
      %s130 = sphi 0, %s127
      %s131 = sphi 0, %s130
      %s147 = sphi 0, %s131
      %s153 = sphi 0, %s155
      %s156 = sphi 0, %s153
      %s157 = sphi 0, %s156
      %s173 = sphi 0, %s157
      %s179 = sphi 0, %s181
      %s182 = sphi 0, %s179
      %s183 = sphi 0, %s182
      %s199 = sphi 0, %s183
      %s203 = sphi 0, %s203
      %s205 = sphi 0, %s203
      %s206 = sphi 0, %s205
      %s220 = sphi 0, %s206
    $region4: #{tpu_custom_call.1} parent=1 // loop_header_branch
      %21 = sbr.rel (%p19) target = $region8
    $region5: #{tpu_custom_call.1} parent=1 // loop_body
      %s23 = ssub.s32 %s18, 1
      %s24 = ssub.s32 %s18, 2
      %s25 = sadd.s32 %s18, 1
      %s27 = sadd.s32 %s26, 1
      %p30 = scmp.eq.s32.totalorder %s18, 1
      %p31 = scmp.ne.s32.totalorder %s26, %s28
      %p32 = scmp.eq.s32.totalorder %s18, 0
      %p33 = por %p31, %p32
      %p34 = scmp.ne.s32.totalorder %s26, %s28
      %p35 = scmp.eq.s32.totalorder %s23, 1
      %p36 = por %p34, %p35
      %p37 = scmp.ne.s32.totalorder %s28, %s29
      %p38 = scmp.eq.s32.totalorder %s23, 0
      %p39 = por %p37, %p38
      %p40 = scmp.ne.s32.totalorder %s28, %s29
      %p41 = scmp.eq.s32.totalorder %s24, 1
      %p42 = por %p40, %p41
      %p44 = scmp.ne.s32.totalorder %s29, %s43
      %p45 = scmp.eq.s32.totalorder %s24, 0
      %p46 = por %p44, %p45
      %s47 = ssub.s32 %s18, %s25
      %p48 = scmp.eq.s32.totalorder %s47, 0
      %s50 = sadd.s32 %s49, 1
      %s51 = scalar_select %p48, %s49, %s50
      %p54 = pneg %p48
      %p55 = scmp.eq.s32.totalorder %s18, 1
      %p56 = por %p54, %p55
      %p57 = scmp.ne.s32.totalorder %s49, %s52
      %p58 = scmp.eq.s32.totalorder %s18, 0
      %p59 = por %p57, %p58
      %p60 = scmp.ne.s32.totalorder %s49, %s52
      %p61 = scmp.eq.s32.totalorder %s23, 1
      %p62 = por %p60, %p61
      %p63 = scmp.ne.s32.totalorder %s52, %s53
      %p64 = scmp.eq.s32.totalorder %s23, 0
      %p65 = por %p63, %p64
      %p66 = scmp.ne.s32.totalorder %s52, %s53
      %p67 = scmp.eq.s32.totalorder %s24, 1
      %p68 = por %p66, %p67
      %p70 = scmp.ne.s32.totalorder %s53, %s69
      %p71 = scmp.eq.s32.totalorder %s24, 0
      %p72 = por %p70, %p71
      %s73 = ssub.s32 %s18, %s25
      %p74 = scmp.eq.s32.totalorder %s73, 0
      %s76 = sadd.s32 %s75, 1
      %s77 = scalar_select %p74, %s75, %s76
      %p80 = pneg %p74
      %p81 = scmp.eq.s32.totalorder %s18, 1
      %p82 = por %p80, %p81
      %p83 = scmp.ne.s32.totalorder %s75, %s78
      %p84 = scmp.eq.s32.totalorder %s18, 0
      %p85 = por %p83, %p84
      %p86 = scmp.ne.s32.totalorder %s75, %s78
      %p87 = scmp.eq.s32.totalorder %s23, 1
      %p88 = por %p86, %p87
      %p89 = scmp.ne.s32.totalorder %s78, %s79
      %p90 = scmp.eq.s32.totalorder %s23, 0
      %p91 = por %p89, %p90
      %p92 = scmp.ne.s32.totalorder %s78, %s79
      %p93 = scmp.eq.s32.totalorder %s24, 1
      %p94 = por %p92, %p93
      %p96 = scmp.ne.s32.totalorder %s79, %s95
      %p97 = scmp.eq.s32.totalorder %s24, 0
      %p98 = por %p96, %p97
      %s99 = ssub.s32 %s18, %s25
      %p100 = scmp.eq.s32.totalorder %s99, 0
      %s102 = sadd.s32 %s101, 1
      %s103 = scalar_select %p100, %s101, %s102
      %p106 = pneg %p100
      %p107 = scmp.eq.s32.totalorder %s18, 1
      %p108 = por %p106, %p107
      %p109 = scmp.ne.s32.totalorder %s101, %s104
      %p110 = scmp.eq.s32.totalorder %s18, 0
      %p111 = por %p109, %p110
      %p112 = scmp.ne.s32.totalorder %s101, %s104
      %p113 = scmp.eq.s32.totalorder %s23, 1
      %p114 = por %p112, %p113
      %p115 = scmp.ne.s32.totalorder %s104, %s105
      %p116 = scmp.eq.s32.totalorder %s23, 0
      %p117 = por %p115, %p116
      %p118 = scmp.ne.s32.totalorder %s104, %s105
      %p119 = scmp.eq.s32.totalorder %s24, 1
      %p120 = por %p118, %p119
      %p122 = scmp.ne.s32.totalorder %s105, %s121
      %p123 = scmp.eq.s32.totalorder %s24, 0
      %p124 = por %p122, %p123
      %s125 = ssub.s32 %s18, %s25
      %p126 = scmp.eq.s32.totalorder %s125, 0
      %s128 = sadd.s32 %s127, 1
      %s129 = scalar_select %p126, %s127, %s128
      %p132 = pneg %p126
      %p133 = scmp.eq.s32.totalorder %s18, 1
      %p134 = por %p132, %p133
      %p135 = scmp.ne.s32.totalorder %s127, %s130
      %p136 = scmp.eq.s32.totalorder %s18, 0
      %p137 = por %p135, %p136
      %p138 = scmp.ne.s32.totalorder %s127, %s130
      %p139 = scmp.eq.s32.totalorder %s23, 1
      %p140 = por %p138, %p139
      %p141 = scmp.ne.s32.totalorder %s130, %s131
      %p142 = scmp.eq.s32.totalorder %s23, 0
      %p143 = por %p141, %p142
      %p144 = scmp.ne.s32.totalorder %s130, %s131
      %p145 = scmp.eq.s32.totalorder %s24, 1
      %p146 = por %p144, %p145
      %p148 = scmp.ne.s32.totalorder %s131, %s147
      %p149 = scmp.eq.s32.totalorder %s24, 0
      %p150 = por %p148, %p149
      %s151 = ssub.s32 %s18, %s25
      %p152 = scmp.eq.s32.totalorder %s151, 0
      %s154 = sadd.s32 %s153, 1
      %s155 = scalar_select %p152, %s153, %s154
      %p158 = pneg %p152
      %p159 = scmp.eq.s32.totalorder %s18, 1
      %p160 = por %p158, %p159
      %p161 = scmp.ne.s32.totalorder %s153, %s156
      %p162 = scmp.eq.s32.totalorder %s18, 0
      %p163 = por %p161, %p162
      %p164 = scmp.ne.s32.totalorder %s153, %s156
      %p165 = scmp.eq.s32.totalorder %s23, 1
      %p166 = por %p164, %p165
      %p167 = scmp.ne.s32.totalorder %s156, %s157
      %p168 = scmp.eq.s32.totalorder %s23, 0
      %p169 = por %p167, %p168
      %p170 = scmp.ne.s32.totalorder %s156, %s157
      %p171 = scmp.eq.s32.totalorder %s24, 1
      %p172 = por %p170, %p171
      %p174 = scmp.ne.s32.totalorder %s157, %s173
      %p175 = scmp.eq.s32.totalorder %s24, 0
      %p176 = por %p174, %p175
      %s177 = ssub.s32 %s18, %s25
      %p178 = scmp.eq.s32.totalorder %s177, 0
      %s180 = sadd.s32 %s179, 1
      %s181 = scalar_select %p178, %s179, %s180
      %p184 = pneg %p178
      %p185 = scmp.eq.s32.totalorder %s18, 1
      %p186 = por %p184, %p185
      %p187 = scmp.ne.s32.totalorder %s179, %s182
      %p188 = scmp.eq.s32.totalorder %s18, 0
      %p189 = por %p187, %p188
      %p190 = scmp.ne.s32.totalorder %s179, %s182
      %p191 = scmp.eq.s32.totalorder %s23, 1
      %p192 = por %p190, %p191
      %p193 = scmp.ne.s32.totalorder %s182, %s183
      %p194 = scmp.eq.s32.totalorder %s23, 0
      %p195 = por %p193, %p194
      %p196 = scmp.ne.s32.totalorder %s182, %s183
      %p197 = scmp.eq.s32.totalorder %s24, 1
      %p198 = por %p196, %p197
      %p200 = scmp.ne.s32.totalorder %s183, %s199
      %p201 = scmp.eq.s32.totalorder %s24, 0
      %p202 = por %p200, %p201
      %s204 = sadd.s32 %s203, 1
      %p207 = scmp.eq.s32.totalorder %s18, 1
      %p208 = scmp.ne.s32.totalorder %s203, %s205
      %p209 = scmp.eq.s32.totalorder %s18, 0
      %p210 = por %p208, %p209
      %p211 = scmp.ne.s32.totalorder %s203, %s205
      %p212 = scmp.eq.s32.totalorder %s23, 1
      %p213 = por %p211, %p212
      %p214 = scmp.ne.s32.totalorder %s205, %s206
      %p215 = scmp.eq.s32.totalorder %s23, 0
      %p216 = por %p214, %p215
      %p217 = scmp.ne.s32.totalorder %s205, %s206
      %p218 = scmp.eq.s32.totalorder %s24, 1
      %p219 = por %p217, %p218
      %p221 = scmp.ne.s32.totalorder %s206, %s220
      %p222 = scmp.eq.s32.totalorder %s24, 0
      %p223 = por %p221, %p222
      %p224 = scmp.le.s32.totalorder 1, %s18
      %p225 = scmp.lt.s32.totalorder %s18, 3
      %p226 = pnand %p224, %p225
      %p227 = pneg %p226
      // Predicated region
      $region9: #{tpu_custom_call.1} parent=5 // pred_check
        _
      $region10: #{tpu_custom_call.1} parent=5 // pred_check_branch
        %229 = sbr.rel (%p226) target = $region12
      $region11: #{tpu_custom_call.1} parent=5 // pred_region
        %s230 = ssub.s32 %s18, 1
        // Predicated region
        $region13: #{tpu_custom_call.1} parent=11 // pred_check
          %p231 = pneg %p39
        $region14: #{tpu_custom_call.1} parent=11 // pred_check_branch
          %233 = sbr.rel (%p231) target = $region16
        $region15: #{tpu_custom_call.1} parent=11 // pred_region
          %s235 = ssub.s32 512, 512
          %236 = vsyncadd [#allocation3], %s235
          %s237 = sshll.u32 [#allocation2], 4
          %s238 = int_to_ptr.vmem [resolvable:$true] %s237
          %243 = dma.hbm_to_vmem [thread:$0]  %s0, 512, %s238, [#allocation3], 128, 128, 8
        $region16: #{tpu_custom_call.1} parent=11 // pred_fallthru
          _
      $region12: #{tpu_custom_call.1} parent=5 // pred_fallthru
        _
      %p244 = scmp.lt.s32.totalorder %s18, 2
      // Predicated region
      $region17: #{tpu_custom_call.1} parent=5 // pred_check
        %p245 = pneg %p244
      $region18: #{tpu_custom_call.1} parent=5 // pred_check_branch
        %247 = sbr.rel (%p245) target = $region20
      $region19: #{tpu_custom_call.1} parent=5 // pred_region
        // Predicated region
        $region21: #{tpu_custom_call.1} parent=19 // pred_check
          %p248 = pneg %p59
        $region22: #{tpu_custom_call.1} parent=19 // pred_check_branch
          %250 = sbr.rel (%p248) target = $region24
        $region23: #{tpu_custom_call.1} parent=19 // pred_region
          %s251 = sand.u32 %s18, 1
          %s252 = scalar_lea.sflag [#allocation6], %s251
          %s253 = sand.u32 %s49, 1
          %s254 = smul.addr %s253, 64
          %s255 = scalar_lea.vmem [#allocation5], %s254
          %s257 = ssub.s32 1024, 1024
          %258 = vsyncadd %s252, %s257
          %s259 = smul.addr %s18, 16
          %s260 = smul.addr %s259, 64
          %s261 = scalar_lea.hbm %s1, %s260
          %s262 = sshll.u32 %s255, 4
          %s263 = int_to_ptr.vmem [resolvable:$true] %s262
          %268 = dma.hbm_to_vmem [thread:$0]  %s261, 1024, %s263, %s252, 64, 64, 4
        $region24: #{tpu_custom_call.1} parent=19 // pred_fallthru
          _
        // Predicated region
        $region25: #{tpu_custom_call.1} parent=19 // pred_check
          %p269 = pneg %p85
        $region26: #{tpu_custom_call.1} parent=19 // pred_check_branch
          %271 = sbr.rel (%p269) target = $region28
        $region27: #{tpu_custom_call.1} parent=19 // pred_region
          %s272 = sand.u32 %s18, 1
          %s273 = scalar_lea.sflag [#allocation6], %s272
          %s274 = sand.u32 %s75, 1
          %s275 = smul.addr %s274, 192
          %s276 = scalar_lea.vmem [#allocation7], %s275
          %s278 = ssub.s32 3072, 3072
          %279 = vsyncadd %s273, %s278
          %s280 = smul.addr %s18, 48
          %s281 = smul.addr %s280, 64
          %s282 = scalar_lea.hbm %s2, %s281
          %s283 = sshll.u32 %s276, 4
          %s284 = int_to_ptr.vmem [resolvable:$true] %s283
          %289 = dma.hbm_to_vmem [thread:$0]  %s282, 3072, %s284, %s273, 64, 64, 4
        $region28: #{tpu_custom_call.1} parent=19 // pred_fallthru
          _
        // Predicated region
        $region29: #{tpu_custom_call.1} parent=19 // pred_check
          %p290 = pneg %p111
        $region30: #{tpu_custom_call.1} parent=19 // pred_check_branch
          %292 = sbr.rel (%p290) target = $region32
        $region31: #{tpu_custom_call.1} parent=19 // pred_region
          %p293 = scmp.lt.s32.totalorder %s18, 1
          %s294 = scalar_select %p293, %s18, 1
          %s295 = scalar_lea.vmem %s3, %s294
        $region32: #{tpu_custom_call.1} parent=19 // pred_fallthru
          _
        // Predicated region
        $region33: #{tpu_custom_call.1} parent=19 // pred_check
          %p296 = pneg %p137
        $region34: #{tpu_custom_call.1} parent=19 // pred_check_branch
          %298 = sbr.rel (%p296) target = $region36
        $region35: #{tpu_custom_call.1} parent=19 // pred_region
          %p299 = scmp.lt.s32.totalorder %s18, 1
          %s300 = scalar_select %p299, %s18, 1
          %s301 = scalar_lea.vmem %s4, %s300
        $region36: #{tpu_custom_call.1} parent=19 // pred_fallthru
          _
        // Predicated region
        $region37: #{tpu_custom_call.1} parent=19 // pred_check
          %p302 = pneg %p163
        $region38: #{tpu_custom_call.1} parent=19 // pred_check_branch
          %304 = sbr.rel (%p302) target = $region40
        $region39: #{tpu_custom_call.1} parent=19 // pred_region
          %p305 = scmp.lt.s32.totalorder %s18, 1
          %s306 = scalar_select %p305, %s18, 1
          %s307 = scalar_lea.vmem %s5, %s306
        $region40: #{tpu_custom_call.1} parent=19 // pred_fallthru
          _
        // Predicated region
        $region41: #{tpu_custom_call.1} parent=19 // pred_check
          %p308 = pneg %p189
        $region42: #{tpu_custom_call.1} parent=19 // pred_check_branch
          %310 = sbr.rel (%p308) target = $region44
        $region43: #{tpu_custom_call.1} parent=19 // pred_region
          %p311 = scmp.lt.s32.totalorder %s18, 1
          %s312 = scalar_select %p311, %s18, 1
          %s313 = scalar_lea.vmem %s6, %s312
        $region44: #{tpu_custom_call.1} parent=19 // pred_fallthru
          _
      $region20: #{tpu_custom_call.1} parent=5 // pred_fallthru
        _
      %p314 = scmp.le.s32.totalorder 1, %s18
      %p315 = scmp.lt.s32.totalorder %s18, 3
      %p316 = pnand %p314, %p315
      %p317 = pneg %p316
      // Predicated region
      $region45: #{tpu_custom_call.1} parent=5 // pred_check
        _
      $region46: #{tpu_custom_call.1} parent=5 // pred_check_branch
        %319 = sbr.rel (%p316) target = $region48
      $region47: #{tpu_custom_call.1} parent=5 // pred_region
        %s320 = ssub.s32 %s18, 1
        // Predicated region
        $region49: #{tpu_custom_call.1} parent=47 // pred_check
          %p321 = pneg %p39
        $region50: #{tpu_custom_call.1} parent=47 // pred_check_branch
          %323 = sbr.rel (%p321) target = $region52
        $region51: #{tpu_custom_call.1} parent=47 // pred_region
          %324 = dma.done [#allocation3], 512
        $region52: #{tpu_custom_call.1} parent=47 // pred_fallthru
          _
        %s325 = sand.u32 %s23, 1
        %s326 = scalar_lea.sflag [#allocation6], %s325
        %s327 = sand.u32 %s52, 1
        %s328 = smul.addr %s327, 64
        %s329 = scalar_lea.vmem [#allocation5], %s328
        // Predicated region
        $region53: #{tpu_custom_call.1} parent=47 // pred_check
          %p330 = pneg %p65
        $region54: #{tpu_custom_call.1} parent=47 // pred_check_branch
          %332 = sbr.rel (%p330) target = $region56
        $region55: #{tpu_custom_call.1} parent=47 // pred_region
          %333 = dma.done %s326, 1024
        $region56: #{tpu_custom_call.1} parent=47 // pred_fallthru
          _
        %s334 = sand.u32 %s23, 1
        %s335 = scalar_lea.sflag [#allocation6], %s334
        %s336 = sand.u32 %s78, 1
        %s337 = smul.addr %s336, 192
        %s338 = scalar_lea.vmem [#allocation7], %s337
        // Predicated region
        $region57: #{tpu_custom_call.1} parent=47 // pred_check
          %p339 = pneg %p91
        $region58: #{tpu_custom_call.1} parent=47 // pred_check_branch
          %341 = sbr.rel (%p339) target = $region60
        $region59: #{tpu_custom_call.1} parent=47 // pred_region
          %342 = dma.done %s335, 3072
        $region60: #{tpu_custom_call.1} parent=47 // pred_fallthru
          _
        %p343 = pneg %p39
        %p344 = pneg %p36
        %s345 = sand.u32 %s23, 1
        %s346 = scalar_lea.sflag [#allocation6], %s345
        %s347 = sand.u32 %s52, 1
        %s348 = smul.addr %s347, 64
        %s349 = scalar_lea.vmem [#allocation5], %s348
        %p350 = pneg %p65
        %p351 = pneg %p62
        %s352 = sand.u32 %s23, 1
        %s353 = scalar_lea.sflag [#allocation6], %s352
        %s354 = sand.u32 %s78, 1
        %s355 = smul.addr %s354, 192
        %s356 = scalar_lea.vmem [#allocation7], %s355
        %p357 = pneg %p91
        %p358 = pneg %p88
        %p359 = scmp.lt.s32.totalorder %s23, 1
        %s360 = scalar_select %p359, %s23, 1
        %s361 = scalar_lea.vmem %s3, %s360
        %p362 = pneg %p117
        %p363 = pneg %p114
        %p364 = scmp.lt.s32.totalorder %s23, 1
        %s365 = scalar_select %p364, %s23, 1
        %s366 = scalar_lea.vmem %s4, %s365
        %p367 = pneg %p143
        %p368 = pneg %p140
        %p369 = scmp.lt.s32.totalorder %s23, 1
        %s370 = scalar_select %p369, %s23, 1
        %s371 = scalar_lea.vmem %s5, %s370
        %p372 = pneg %p169
        %p373 = pneg %p166
        %p374 = scmp.lt.s32.totalorder %s23, 1
        %s375 = scalar_select %p374, %s23, 1
        %s376 = scalar_lea.vmem %s6, %s375
        %p377 = pneg %p195
        %p378 = pneg %p192
        %p379 = pneg %p216
        %p380 = pneg %p213
        %p381 = scmp.lt.s32.totalorder %s23, 1
        %s382 = scalar_select %p381, %s23, 1
        %s383 = scalar_lea.vmem %s3, %s382
        %p384 = scmp.lt.s32.totalorder %s23, 1
        %s385 = scalar_select %p384, %s23, 1
        %s386 = scalar_lea.vmem %s4, %s385
        %p387 = scmp.lt.s32.totalorder %s23, 1
        %s388 = scalar_select %p387, %s23, 1
        %s389 = scalar_lea.vmem %s5, %s388
        %p390 = scmp.lt.s32.totalorder %s23, 1
        %s391 = scalar_select %p390, %s23, 1
        %s392 = scalar_lea.vmem %s6, %s391
        %p394 = scmp.eq.s32.totalorder %s23, 0
        // Predicated region
        $region61: #{tpu_custom_call.1} parent=47 // pred_check
          %p395 = pneg %p394
        $region62: #{tpu_custom_call.1} parent=47 // pred_check_branch
          %397 = sbr.rel (%p395) target = $region64
        $region63: #{tpu_custom_call.1} parent=47 // pred_region
          %v398 = vld [vmem:[#allocation2] sm:$0xff]
          %v399 = vld [vmem:[#allocation2 + $0x8] sm:$0xff]
          %v400 = vld [vmem:[#allocation2 + $0x10] sm:$0xff]
          %v401 = vld [vmem:[#allocation2 + $0x18] sm:$0xff]
          %402 = vst [vmem:[#allocation8] sm:$0xff] %v398
          %403 = vst [vmem:[#allocation8 + $0x8] sm:$0xff] %v399
          %404 = vst [vmem:[#allocation8 + $0x10] sm:$0xff] %v400
          %405 = vst [vmem:[#allocation8 + $0x18] sm:$0xff] %v401
        $region64: #{tpu_custom_call.1} parent=47 // pred_fallthru
          _
        %v406 = vld [vmem:[#allocation8] sm:$0xff]
        %v407 = vld [vmem:[#allocation8 + $0x8] sm:$0xff]
        %v408 = vld [vmem:[#allocation8 + $0x10] sm:$0xff]
        %v409 = vld [vmem:[#allocation8 + $0x18] sm:$0xff]
        %v410 = vpack.c.bf16 %v407, %v406
        %v411 = vpack.c.bf16 %v409, %v408
        %v412 = vld [vmem:[%s329] sm:$0xf]
        %v413 = vld [vmem:[%s329 + $0x4] sm:$0xf]
        %v414 = vld [vmem:[%s329 + $0x8] sm:$0xf]
        %v415 = vld [vmem:[%s329 + $0xc] sm:$0xf]
        %v416 = vld [vmem:[%s329 + $0x10] sm:$0xf]
        %v417 = vld [vmem:[%s329 + $0x14] sm:$0xf]
        %v418 = vld [vmem:[%s329 + $0x18] sm:$0xf]
        %v419 = vld [vmem:[%s329 + $0x1c] sm:$0xf]
        %v420 = vld [vmem:[%s329 + $0x20] sm:$0xf]
        %v421 = vld [vmem:[%s329 + $0x24] sm:$0xf]
        %v422 = vld [vmem:[%s329 + $0x28] sm:$0xf]
        %v423 = vld [vmem:[%s329 + $0x2c] sm:$0xf]
        %v424 = vld [vmem:[%s329 + $0x30] sm:$0xf]
        %v425 = vld [vmem:[%s329 + $0x34] sm:$0xf]
        %v426 = vld [vmem:[%s329 + $0x38] sm:$0xf]
        %v427 = vld [vmem:[%s329 + $0x3c] sm:$0xf]
        %v444 = vunpack.c.l.b16 %v412
        %v445 = vunpack.c.l.b16 %v413
        %v446 = vunpack.c.l.b16 %v414
        %v447 = vunpack.c.l.b16 %v415
        %v448 = vunpack.c.l.b16 %v416
        %v449 = vunpack.c.l.b16 %v417
        %v450 = vunpack.c.l.b16 %v418
        %v451 = vunpack.c.l.b16 %v419
        %v452 = vunpack.c.l.b16 %v420
        %v453 = vunpack.c.l.b16 %v421
        %v454 = vunpack.c.l.b16 %v422
        %v455 = vunpack.c.l.b16 %v423
        %v456 = vunpack.c.l.b16 %v424
        %v457 = vunpack.c.l.b16 %v425
        %v458 = vunpack.c.l.b16 %v426
        %v459 = vunpack.c.l.b16 %v427
        %v460 = vpack.c.b16 %v445, %v444
        %v461 = vpack.c.b16 %v447, %v446
        %v462 = vpack.c.b16 %v449, %v448
        %v463 = vpack.c.b16 %v451, %v450
        %v464 = vpack.c.b16 %v453, %v452
        %v465 = vpack.c.b16 %v455, %v454
        %v466 = vpack.c.b16 %v457, %v456
        %v467 = vpack.c.b16 %v459, %v458
        %476 = vmatprep.subr.bf16.mxu0 0
        %477 = vmatpush1.bf16.msra.mxu0 %v460
        %478 = vmatprep.subr.bf16.mxu0 0
        %479 = vmatpush1.bf16.msra.mxu0 %v461
        %480 = vmatprep.subr.bf16.mxu0 0
        %481 = vmatpush1.bf16.msra.mxu0 %v462
        %482 = vmatprep.subr.bf16.mxu0 0
        %483 = vmatpush1.bf16.msra.mxu0 %v463
        %484 = vmatprep.subr.bf16.mxu0 0
        %485 = vmatpush1.bf16.msra.mxu0 %v464
        %486 = vmatprep.subr.bf16.mxu0 0
        %487 = vmatpush1.bf16.msra.mxu0 %v465
        %488 = vmatprep.subr.bf16.mxu0 0
        %489 = vmatpush1.bf16.msra.mxu0 %v466
        %490 = vmatprep.subr.bf16.mxu0 0
        %491 = vmatpush1.bf16.msra.mxu0 %v467
        %492 = vmatprep.subr.bf16.mxu0 0
        %493 = vmatpush1.bf16.msra.mxu0 0
        %494 = vmatprep.subr.bf16.mxu0 0
        %495 = vmatpush1.bf16.msra.mxu0 0
        %496 = vmatprep.subr.bf16.mxu0 0
        %497 = vmatpush1.bf16.msra.mxu0 0
        %498 = vmatprep.subr.bf16.mxu0 0
        %499 = vmatpush1.bf16.msra.mxu0 0
        %500 = vmatprep.subr.bf16.mxu0 0
        %501 = vmatpush1.bf16.msra.mxu0 0
        %502 = vmatprep.subr.bf16.mxu0 0
        %503 = vmatpush1.bf16.msra.mxu0 0
        %504 = vmatprep.subr.bf16.mxu0 0
        %505 = vmatpush1.bf16.msra.mxu0 0
        %506 = vmatprep.subr.bf16.mxu0 0
        %507 = vmatpush1.bf16.msra.mxu0 0
        %508 = vmatprep.mubr.bf16.mxu0 0
        %509 = vmatmul.mubr.bf16.gmra.mrb[0].mxu0 %v410
        %v510 = vpop.f32.mrb[0].mxu0
        %v511 = vadd.f32 0.0, %v510
        %v512 = vpop.f32.mrb[0].mxu0
        %v513 = vpop.f32.mrb[0].mxu0
        %v514 = vadd.f32 0.0, %v513
        %v515 = vpop.f32.mrb[0].mxu0
        %516 = vmatprep.mubr.bf16.mxu0 0
        %517 = vmatmul.mubr.bf16.gmra.mrb[0].mxu0 %v411
        %v518 = vpop.f32.mrb[0].mxu0
        %v519 = vadd.f32 0.0, %v518
        %v520 = vpop.f32.mrb[0].mxu0
        %v521 = vpop.f32.mrb[0].mxu0
        %v522 = vadd.f32 0.0, %v521
        %v523 = vpop.f32.mrb[0].mxu0
        %524 = vdwg.mxu0
        %v525 = vld [vmem:[%s383] sm:$0x1]
        %v526 = vld [vmem:[%s386] sm:$0x1]
        %v527 = vadd.f32 %v511, %v514
        %v528 = vadd.f32 %v527, %v519
        %v529 = vadd.f32 %v528, %v522
        %v530 = vrot.slane %v529, 4
        %v531 = vadd.f32 %v529, %v530
        %v532 = vrot.slane %v531, 2
        %v533 = vadd.f32 %v531, %v532
        %v534 = vrot.slane %v533, 1
        %v535 = vadd.f32 %v533, %v534
        %v536 = vmul.f32 %v535, 0.03125
        %v537 = vmul.f32 %v511, %v511
        %v538 = vmul.f32 %v514, %v514
        %v539 = vmul.f32 %v519, %v519
        %v540 = vmul.f32 %v522, %v522
        %v541 = vadd.f32 %v537, %v538
        %v542 = vadd.f32 %v541, %v539
        %v543 = vadd.f32 %v542, %v540
        %v544 = vrot.slane %v543, 4
        %v545 = vadd.f32 %v543, %v544
        %v546 = vrot.slane %v545, 2
        %v547 = vadd.f32 %v545, %v546
        %v548 = vrot.slane %v547, 1
        %v549 = vadd.f32 %v547, %v548
        %v550 = vmul.f32 %v549, 0.03125
        %v551 = vmul.f32 %v536, %v536
        %v552 = vsub.f32 %v550, %v551
        %v553 = vsub.f32 %v511, %v536
        %v554 = vsub.f32 %v514, %v536
        %v555 = vsub.f32 %v519, %v536
        %v556 = vsub.f32 %v522, %v536
        %v557 = vadd.f32 %v552, 1e-05
        %v558 = vrsqrt.pop %v557
        %v559 = vmul.f32 %v553, %v558
        %v560 = vmul.f32 %v554, %v558
        %v561 = vmul.f32 %v555, %v558
        %v562 = vmul.f32 %v556, %v558
        %v564 = vlaneseq
        %v565 = vshrl.u32 %v564, 7
        %v566 = vsub.s32 0, %v565
        %v567 = vrot.slane %v525, %v566
        %v569 = vmul.f32 %v559, %v567
        %v570 = vmul.f32 %v560, %v567
        %v571 = vmul.f32 %v561, %v567
        %v572 = vmul.f32 %v562, %v567
        %v574 = vlaneseq
        %v575 = vshrl.u32 %v574, 7
        %v576 = vsub.s32 0, %v575
        %v577 = vrot.slane %v526, %v576
        %v579 = vadd.f32 %v569, %v577
        %v580 = vadd.f32 %v570, %v577
        %v581 = vadd.f32 %v571, %v577
        %v582 = vadd.f32 %v572, %v577
        %v583 = vmul.f32 %v579, 0.1
        %v584 = vmul.f32 %v580, 0.1
        %v585 = vmul.f32 %v581, 0.1
        %v586 = vmul.f32 %v582, 0.1
        %v587 = vmax.f32 %v579, %v583
        %v588 = vmax.f32 %v580, %v584
        %v589 = vmax.f32 %v581, %v585
        %v590 = vmax.f32 %v582, %v586
        %v591 = vlaneseq
        %v592 = vshrl.u32 %v591, 7
        %v593 = vadd.s32 %v592, 8
        %v594 = vadd.s32 %v592, 16
        %v595 = vadd.s32 %v592, 24
        %vm596 = vcmp.lt.s32.totalorder %v592, 0
        %v597 = vsub.s32 0, %v592
        %v598 = vsel %vm596, %v597, %v592
        %v599 = vshrl.u32 %v598, 4
        %v600 = vand.u32 %v598, 15
        %v601 = vsub.s32 0, %v600
        %v602 = vsel %vm596, %v601, %v600
        %vm603 = vcmp.lt.s32.totalorder %v593, 0
        %v604 = vsub.s32 0, %v593
        %v605 = vsel %vm603, %v604, %v593
        %v606 = vshrl.u32 %v605, 4
        %v607 = vand.u32 %v605, 15
        %v608 = vsub.s32 0, %v607
        %v609 = vsel %vm603, %v608, %v607
        %vm610 = vcmp.lt.s32.totalorder %v594, 0
        %v611 = vsub.s32 0, %v594
        %v612 = vsel %vm610, %v611, %v594
        %v613 = vshrl.u32 %v612, 4
        %v614 = vand.u32 %v612, 15
        %v615 = vsub.s32 0, %v614
        %v616 = vsel %vm610, %v615, %v614
        %vm617 = vcmp.lt.s32.totalorder %v595, 0
        %v618 = vsub.s32 0, %v595
        %v619 = vsel %vm617, %v618, %v595
        %v620 = vshrl.u32 %v619, 4
        %v621 = vand.u32 %v619, 15
        %v622 = vsub.s32 0, %v621
        %v623 = vsel %vm617, %v622, %v621
        %vm624 = vcmp.ne.s32.totalorder %v602, 0
        %vm625 = vcmp.ne.s32.totalorder %v609, 0
        %vm626 = vcmp.ne.s32.totalorder %v616, 0
        %vm627 = vcmp.ne.s32.totalorder %v623, 0
        %vm628 = vcmp.lt.s32.totalorder %v602, 0
        %vm629 = vcmp.lt.s32.totalorder %v609, 0
        %vm630 = vcmp.lt.s32.totalorder %v616, 0
        %vm631 = vcmp.lt.s32.totalorder %v623, 0
        %vm632 = vmand %vm628, %vm624
        %vm633 = vmand %vm629, %vm625
        %vm634 = vmand %vm630, %vm626
        %vm635 = vmand %vm631, %vm627
        %v636 = vadd.s32 %v602, 16
        %v637 = vadd.s32 %v609, 16
        %v638 = vadd.s32 %v616, 16
        %v639 = vadd.s32 %v623, 16
        %v640 = vsel %vm632, %v636, %v602
        %v641 = vsel %vm633, %v637, %v609
        %v642 = vsel %vm634, %v638, %v616
        %v643 = vsel %vm635, %v639, %v623
        %vm644 = vcmp.eq.s32.totalorder %v640, 0
        %vm645 = vcmp.eq.s32.totalorder %v641, 0
        %vm646 = vcmp.eq.s32.totalorder %v642, 0
        %vm647 = vcmp.eq.s32.totalorder %v643, 0
        %v648 = vrot.slane %v587, 7
        %v649 = vrot.slane %v588, 7
        %v650 = vrot.slane %v589, 7
        %v651 = vrot.slane %v590, 7
        %vm652 = vcmp.lt.s32.totalorder %v592, 1
        %v653 = vsel %vm652, %v650, %v651
        %v654 = vsel %vm652, %v649, %v650
        %v655 = vsel %vm652, %v648, %v649
        %v656 = vsel %vm652, %v651, %v648
        %v657 = vsel %vm644, 0.0, %v656
        %v658 = vsel %vm645, 0.0, %v655
        %v659 = vsel %vm646, 0.0, %v654
        %v660 = vsel %vm647, 0.0, %v653
        %v661 = vpack.c.bf16 %v658, %v657
        %v662 = vpack.c.bf16 %v660, %v659
        %vm663 = vcmp.eq.s32.totalorder %v640, 15
        %vm664 = vcmp.eq.s32.totalorder %v641, 15
        %vm665 = vcmp.eq.s32.totalorder %v642, 15
        %vm666 = vcmp.eq.s32.totalorder %v643, 15
        %v667 = vrot.slane %v587, 1
        %v668 = vrot.slane %v588, 1
        %v669 = vrot.slane %v589, 1
        %v670 = vrot.slane %v590, 1
        %vm671 = vcmp.lt.s32.totalorder %v592, 7
        %v672 = vsel %vm671, %v669, %v670
        %v673 = vsel %vm671, %v668, %v669
        %v674 = vsel %vm671, %v667, %v668
        %v675 = vsel %vm671, %v670, %v667
        %v676 = vsel %vm663, 0.0, %v674
        %v677 = vsel %vm664, 0.0, %v673
        %v678 = vsel %vm665, 0.0, %v672
        %v679 = vsel %vm666, 0.0, %v675
        %v680 = vpack.c.bf16 %v677, %v676
        %v681 = vpack.c.bf16 %v679, %v678
        %v682 = vpack.c.bf16 %v588, %v587
        %v683 = vpack.c.bf16 %v590, %v589
        %s684 = scalar_lea.vmem %s338, 64 [#allocation7]
        %v685 = vld [vmem:[%s684] sm:$0xf]
        %v686 = vld [vmem:[%s684 + $0x4] sm:$0xf]
        %v687 = vld [vmem:[%s684 + $0x8] sm:$0xf]
        %v688 = vld [vmem:[%s684 + $0xc] sm:$0xf]
        %v689 = vld [vmem:[%s684 + $0x10] sm:$0xf]
        %v690 = vld [vmem:[%s684 + $0x14] sm:$0xf]
        %v691 = vld [vmem:[%s684 + $0x18] sm:$0xf]
        %v692 = vld [vmem:[%s684 + $0x1c] sm:$0xf]
        %v693 = vld [vmem:[%s684 + $0x20] sm:$0xf]
        %v694 = vld [vmem:[%s684 + $0x24] sm:$0xf]
        %v695 = vld [vmem:[%s684 + $0x28] sm:$0xf]
        %v696 = vld [vmem:[%s684 + $0x2c] sm:$0xf]
        %v697 = vld [vmem:[%s684 + $0x30] sm:$0xf]
        %v698 = vld [vmem:[%s684 + $0x34] sm:$0xf]
        %v699 = vld [vmem:[%s684 + $0x38] sm:$0xf]
        %v700 = vld [vmem:[%s684 + $0x3c] sm:$0xf]
        %v701 = vld [vmem:[%s338] sm:$0xf]
        %v702 = vld [vmem:[%s338 + $0x4] sm:$0xf]
        %v703 = vld [vmem:[%s338 + $0x8] sm:$0xf]
        %v704 = vld [vmem:[%s338 + $0xc] sm:$0xf]
        %v705 = vld [vmem:[%s338 + $0x10] sm:$0xf]
        %v706 = vld [vmem:[%s338 + $0x14] sm:$0xf]
        %v707 = vld [vmem:[%s338 + $0x18] sm:$0xf]
        %v708 = vld [vmem:[%s338 + $0x1c] sm:$0xf]
        %v709 = vld [vmem:[%s338 + $0x20] sm:$0xf]
        %v710 = vld [vmem:[%s338 + $0x24] sm:$0xf]
        %v711 = vld [vmem:[%s338 + $0x28] sm:$0xf]
        %v712 = vld [vmem:[%s338 + $0x2c] sm:$0xf]
        %v713 = vld [vmem:[%s338 + $0x30] sm:$0xf]
        %v714 = vld [vmem:[%s338 + $0x34] sm:$0xf]
        %v715 = vld [vmem:[%s338 + $0x38] sm:$0xf]
        %v716 = vld [vmem:[%s338 + $0x3c] sm:$0xf]
        %v733 = vunpack.c.l.b16 %v701
        %v734 = vunpack.c.l.b16 %v702
        %v735 = vunpack.c.l.b16 %v703
        %v736 = vunpack.c.l.b16 %v704
        %v737 = vunpack.c.l.b16 %v705
        %v738 = vunpack.c.l.b16 %v706
        %v739 = vunpack.c.l.b16 %v707
        %v740 = vunpack.c.l.b16 %v708
        %v741 = vunpack.c.l.b16 %v709
        %v742 = vunpack.c.l.b16 %v710
        %v743 = vunpack.c.l.b16 %v711
        %v744 = vunpack.c.l.b16 %v712
        %v745 = vunpack.c.l.b16 %v713
        %v746 = vunpack.c.l.b16 %v714
        %v747 = vunpack.c.l.b16 %v715
        %v748 = vunpack.c.l.b16 %v716
        %v749 = vpack.c.b16 %v734, %v733
        %v750 = vpack.c.b16 %v736, %v735
        %v751 = vpack.c.b16 %v738, %v737
        %v752 = vpack.c.b16 %v740, %v739
        %v753 = vpack.c.b16 %v742, %v741
        %v754 = vpack.c.b16 %v744, %v743
        %v755 = vpack.c.b16 %v746, %v745
        %v756 = vpack.c.b16 %v748, %v747
        %765 = vmatprep.subr.bf16.mxu0 0
        %766 = vmatpush1.bf16.msra.mxu0 %v749
        %767 = vmatprep.subr.bf16.mxu0 0
        %768 = vmatpush1.bf16.msra.mxu0 %v750
        %769 = vmatprep.subr.bf16.mxu0 0
        %770 = vmatpush1.bf16.msra.mxu0 %v751
        %771 = vmatprep.subr.bf16.mxu0 0
        %772 = vmatpush1.bf16.msra.mxu0 %v752
        %773 = vmatprep.subr.bf16.mxu0 0
        %774 = vmatpush1.bf16.msra.mxu0 %v753
        %775 = vmatprep.subr.bf16.mxu0 0
        %776 = vmatpush1.bf16.msra.mxu0 %v754
        %777 = vmatprep.subr.bf16.mxu0 0
        %778 = vmatpush1.bf16.msra.mxu0 %v755
        %779 = vmatprep.subr.bf16.mxu0 0
        %780 = vmatpush1.bf16.msra.mxu0 %v756
        %781 = vmatprep.subr.bf16.mxu0 0
        %782 = vmatpush1.bf16.msra.mxu0 0
        %783 = vmatprep.subr.bf16.mxu0 0
        %784 = vmatpush1.bf16.msra.mxu0 0
        %785 = vmatprep.subr.bf16.mxu0 0
        %786 = vmatpush1.bf16.msra.mxu0 0
        %787 = vmatprep.subr.bf16.mxu0 0
        %788 = vmatpush1.bf16.msra.mxu0 0
        %789 = vmatprep.subr.bf16.mxu0 0
        %790 = vmatpush1.bf16.msra.mxu0 0
        %791 = vmatprep.subr.bf16.mxu0 0
        %792 = vmatpush1.bf16.msra.mxu0 0
        %793 = vmatprep.subr.bf16.mxu0 0
        %794 = vmatpush1.bf16.msra.mxu0 0
        %795 = vmatprep.subr.bf16.mxu0 0
        %796 = vmatpush1.bf16.msra.mxu0 0
        %797 = vmatprep.mubr.bf16.mxu0 0
        %798 = vmatmul.mubr.bf16.gmra.mrb[0].mxu0 %v661
        %v799 = vpop.f32.mrb[0].mxu0
        %v800 = vadd.f32 0.0, %v799
        %v801 = vpop.f32.mrb[0].mxu0
        %v802 = vpop.f32.mrb[0].mxu0
        %v803 = vadd.f32 0.0, %v802
        %v804 = vpop.f32.mrb[0].mxu0
        %805 = vmatprep.mubr.bf16.mxu0 0
        %806 = vmatmul.mubr.bf16.gmra.mrb[0].mxu0 %v662
        %v807 = vpop.f32.mrb[0].mxu0
        %v808 = vadd.f32 0.0, %v807
        %v809 = vpop.f32.mrb[0].mxu0
        %v810 = vpop.f32.mrb[0].mxu0
        %v811 = vadd.f32 0.0, %v810
        %v812 = vpop.f32.mrb[0].mxu0
        %813 = vdwg.mxu0
        %v830 = vunpack.c.l.b16 %v685
        %v831 = vunpack.c.l.b16 %v686
        %v832 = vunpack.c.l.b16 %v687
        %v833 = vunpack.c.l.b16 %v688
        %v834 = vunpack.c.l.b16 %v689
        %v835 = vunpack.c.l.b16 %v690
        %v836 = vunpack.c.l.b16 %v691
        %v837 = vunpack.c.l.b16 %v692
        %v838 = vunpack.c.l.b16 %v693
        %v839 = vunpack.c.l.b16 %v694
        %v840 = vunpack.c.l.b16 %v695
        %v841 = vunpack.c.l.b16 %v696
        %v842 = vunpack.c.l.b16 %v697
        %v843 = vunpack.c.l.b16 %v698
        %v844 = vunpack.c.l.b16 %v699
        %v845 = vunpack.c.l.b16 %v700
        %v846 = vpack.c.b16 %v831, %v830
        %v847 = vpack.c.b16 %v833, %v832
        %v848 = vpack.c.b16 %v835, %v834
        %v849 = vpack.c.b16 %v837, %v836
        %v850 = vpack.c.b16 %v839, %v838
        %v851 = vpack.c.b16 %v841, %v840
        %v852 = vpack.c.b16 %v843, %v842
        %v853 = vpack.c.b16 %v845, %v844
        %862 = vmatprep.subr.bf16.mxu0 0
        %863 = vmatpush1.bf16.msra.mxu0 %v846
        %864 = vmatprep.subr.bf16.mxu0 0
        %865 = vmatpush1.bf16.msra.mxu0 %v847
        %866 = vmatprep.subr.bf16.mxu0 0
        %867 = vmatpush1.bf16.msra.mxu0 %v848
        %868 = vmatprep.subr.bf16.mxu0 0
        %869 = vmatpush1.bf16.msra.mxu0 %v849
        %870 = vmatprep.subr.bf16.mxu0 0
        %871 = vmatpush1.bf16.msra.mxu0 %v850
        %872 = vmatprep.subr.bf16.mxu0 0
        %873 = vmatpush1.bf16.msra.mxu0 %v851
        %874 = vmatprep.subr.bf16.mxu0 0
        %875 = vmatpush1.bf16.msra.mxu0 %v852
        %876 = vmatprep.subr.bf16.mxu0 0
        %877 = vmatpush1.bf16.msra.mxu0 %v853
        %878 = vmatprep.subr.bf16.mxu0 0
        %879 = vmatpush1.bf16.msra.mxu0 0
        %880 = vmatprep.subr.bf16.mxu0 0
        %881 = vmatpush1.bf16.msra.mxu0 0
        %882 = vmatprep.subr.bf16.mxu0 0
        %883 = vmatpush1.bf16.msra.mxu0 0
        %884 = vmatprep.subr.bf16.mxu0 0
        %885 = vmatpush1.bf16.msra.mxu0 0
        %886 = vmatprep.subr.bf16.mxu0 0
        %887 = vmatpush1.bf16.msra.mxu0 0
        %888 = vmatprep.subr.bf16.mxu0 0
        %889 = vmatpush1.bf16.msra.mxu0 0
        %890 = vmatprep.subr.bf16.mxu0 0
        %891 = vmatpush1.bf16.msra.mxu0 0
        %892 = vmatprep.subr.bf16.mxu0 0
        %893 = vmatpush1.bf16.msra.mxu0 0
        %894 = vmatprep.mubr.bf16.mxu0 0
        %895 = vmatmul.mubr.bf16.gmra.mrb[0].mxu0 %v682
        %v896 = vpop.f32.mrb[0].mxu0
        %v897 = vadd.f32 %v800, %v896
        %v898 = vpop.f32.mrb[0].mxu0
        %v899 = vpop.f32.mrb[0].mxu0
        %v900 = vadd.f32 %v803, %v899
        %v901 = vpop.f32.mrb[0].mxu0
        %902 = vmatprep.mubr.bf16.mxu0 0
        %903 = vmatmul.mubr.bf16.gmra.mrb[0].mxu0 %v683
        %v904 = vpop.f32.mrb[0].mxu0
        %v905 = vadd.f32 %v808, %v904
        %v906 = vpop.f32.mrb[0].mxu0
        %v907 = vpop.f32.mrb[0].mxu0
        %v908 = vadd.f32 %v811, %v907
        %v909 = vpop.f32.mrb[0].mxu0
        %910 = vdwg.mxu0
        %s911 = scalar_lea.vmem %s338, 128 [#allocation7]
        %v912 = vld [vmem:[%s911] sm:$0xf]
        %v913 = vld [vmem:[%s911 + $0x4] sm:$0xf]
        %v914 = vld [vmem:[%s911 + $0x8] sm:$0xf]
        %v915 = vld [vmem:[%s911 + $0xc] sm:$0xf]
        %v916 = vld [vmem:[%s911 + $0x10] sm:$0xf]
        %v917 = vld [vmem:[%s911 + $0x14] sm:$0xf]
        %v918 = vld [vmem:[%s911 + $0x18] sm:$0xf]
        %v919 = vld [vmem:[%s911 + $0x1c] sm:$0xf]
        %v920 = vld [vmem:[%s911 + $0x20] sm:$0xf]
        %v921 = vld [vmem:[%s911 + $0x24] sm:$0xf]
        %v922 = vld [vmem:[%s911 + $0x28] sm:$0xf]
        %v923 = vld [vmem:[%s911 + $0x2c] sm:$0xf]
        %v924 = vld [vmem:[%s911 + $0x30] sm:$0xf]
        %v925 = vld [vmem:[%s911 + $0x34] sm:$0xf]
        %v926 = vld [vmem:[%s911 + $0x38] sm:$0xf]
        %v927 = vld [vmem:[%s911 + $0x3c] sm:$0xf]
        %v944 = vunpack.c.l.b16 %v912
        %v945 = vunpack.c.l.b16 %v913
        %v946 = vunpack.c.l.b16 %v914
        %v947 = vunpack.c.l.b16 %v915
        %v948 = vunpack.c.l.b16 %v916
        %v949 = vunpack.c.l.b16 %v917
        %v950 = vunpack.c.l.b16 %v918
        %v951 = vunpack.c.l.b16 %v919
        %v952 = vunpack.c.l.b16 %v920
        %v953 = vunpack.c.l.b16 %v921
        %v954 = vunpack.c.l.b16 %v922
        %v955 = vunpack.c.l.b16 %v923
        %v956 = vunpack.c.l.b16 %v924
        %v957 = vunpack.c.l.b16 %v925
        %v958 = vunpack.c.l.b16 %v926
        %v959 = vunpack.c.l.b16 %v927
        %v960 = vpack.c.b16 %v945, %v944
        %v961 = vpack.c.b16 %v947, %v946
        %v962 = vpack.c.b16 %v949, %v948
        %v963 = vpack.c.b16 %v951, %v950
        %v964 = vpack.c.b16 %v953, %v952
        %v965 = vpack.c.b16 %v955, %v954
        %v966 = vpack.c.b16 %v957, %v956
        %v967 = vpack.c.b16 %v959, %v958
        %976 = vmatprep.subr.bf16.mxu0 0
        %977 = vmatpush1.bf16.msra.mxu0 %v960
        %978 = vmatprep.subr.bf16.mxu0 0
        %979 = vmatpush1.bf16.msra.mxu0 %v961
        %980 = vmatprep.subr.bf16.mxu0 0
        %981 = vmatpush1.bf16.msra.mxu0 %v962
        %982 = vmatprep.subr.bf16.mxu0 0
        %983 = vmatpush1.bf16.msra.mxu0 %v963
        %984 = vmatprep.subr.bf16.mxu0 0
        %985 = vmatpush1.bf16.msra.mxu0 %v964
        %986 = vmatprep.subr.bf16.mxu0 0
        %987 = vmatpush1.bf16.msra.mxu0 %v965
        %988 = vmatprep.subr.bf16.mxu0 0
        %989 = vmatpush1.bf16.msra.mxu0 %v966
        %990 = vmatprep.subr.bf16.mxu0 0
        %991 = vmatpush1.bf16.msra.mxu0 %v967
        %992 = vmatprep.subr.bf16.mxu0 0
        %993 = vmatpush1.bf16.msra.mxu0 0
        %994 = vmatprep.subr.bf16.mxu0 0
        %995 = vmatpush1.bf16.msra.mxu0 0
        %996 = vmatprep.subr.bf16.mxu0 0
        %997 = vmatpush1.bf16.msra.mxu0 0
        %998 = vmatprep.subr.bf16.mxu0 0
        %999 = vmatpush1.bf16.msra.mxu0 0
        %1000 = vmatprep.subr.bf16.mxu0 0
        %1001 = vmatpush1.bf16.msra.mxu0 0
        %1002 = vmatprep.subr.bf16.mxu0 0
        %1003 = vmatpush1.bf16.msra.mxu0 0
        %1004 = vmatprep.subr.bf16.mxu0 0
        %1005 = vmatpush1.bf16.msra.mxu0 0
        %1006 = vmatprep.subr.bf16.mxu0 0
        %1007 = vmatpush1.bf16.msra.mxu0 0
        %1008 = vmatprep.mubr.bf16.mxu0 0
        %1009 = vmatmul.mubr.bf16.gmra.mrb[0].mxu0 %v680
        %v1010 = vpop.f32.mrb[0].mxu0
        %v1011 = vadd.f32 0.0, %v1010
        %v1012 = vpop.f32.mrb[0].mxu0
        %v1013 = vpop.f32.mrb[0].mxu0
        %v1014 = vadd.f32 0.0, %v1013
        %v1015 = vpop.f32.mrb[0].mxu0
        %1016 = vmatprep.mubr.bf16.mxu0 0
        %1017 = vmatmul.mubr.bf16.gmra.mrb[0].mxu0 %v681
        %v1018 = vpop.f32.mrb[0].mxu0
        %v1019 = vadd.f32 0.0, %v1018
        %v1020 = vpop.f32.mrb[0].mxu0
        %v1021 = vpop.f32.mrb[0].mxu0
        %v1022 = vadd.f32 0.0, %v1021
        %v1023 = vpop.f32.mrb[0].mxu0
        %1024 = vdwg.mxu0
        %v1025 = vadd.f32 %v897, %v1011
        %v1026 = vadd.f32 %v900, %v1014
        %v1027 = vadd.f32 %v905, %v1019
        %v1028 = vadd.f32 %v908, %v1022
        %v1029 = vld [vmem:[%s389] sm:$0x1]
        %v1030 = vld [vmem:[%s392] sm:$0x1]
        %v1031 = vadd.f32 %v1025, %v1026
        %v1032 = vadd.f32 %v1031, %v1027
        %v1033 = vadd.f32 %v1032, %v1028
        %v1034 = vrot.slane %v1033, 4
        %v1035 = vadd.f32 %v1033, %v1034
        %v1036 = vrot.slane %v1035, 2
        %v1037 = vadd.f32 %v1035, %v1036
        %v1038 = vrot.slane %v1037, 1
        %v1039 = vadd.f32 %v1037, %v1038
        %v1040 = vmul.f32 %v1039, 0.03125
        %v1041 = vmul.f32 %v1025, %v1025
        %v1042 = vmul.f32 %v1026, %v1026
        %v1043 = vmul.f32 %v1027, %v1027
        %v1044 = vmul.f32 %v1028, %v1028
        %v1045 = vadd.f32 %v1041, %v1042
        %v1046 = vadd.f32 %v1045, %v1043
        %v1047 = vadd.f32 %v1046, %v1044
        %v1048 = vrot.slane %v1047, 4
        %v1049 = vadd.f32 %v1047, %v1048
        %v1050 = vrot.slane %v1049, 2
        %v1051 = vadd.f32 %v1049, %v1050
        %v1052 = vrot.slane %v1051, 1
        %v1053 = vadd.f32 %v1051, %v1052
        %v1054 = vmul.f32 %v1053, 0.03125
        %v1055 = vmul.f32 %v1040, %v1040
        %v1056 = vsub.f32 %v1054, %v1055
        %v1057 = vsub.f32 %v1025, %v1040
        %v1058 = vsub.f32 %v1026, %v1040
        %v1059 = vsub.f32 %v1027, %v1040
        %v1060 = vsub.f32 %v1028, %v1040
        %v1061 = vadd.f32 %v1056, 1e-05
        %v1062 = vrsqrt.pop %v1061
        %v1063 = vmul.f32 %v1057, %v1062
        %v1064 = vmul.f32 %v1058, %v1062
        %v1065 = vmul.f32 %v1059, %v1062
        %v1066 = vmul.f32 %v1060, %v1062
        %v1068 = vlaneseq
        %v1069 = vshrl.u32 %v1068, 7
        %v1070 = vsub.s32 0, %v1069
        %v1071 = vrot.slane %v1029, %v1070
        %v1073 = vmul.f32 %v1063, %v1071
        %v1074 = vmul.f32 %v1064, %v1071
        %v1075 = vmul.f32 %v1065, %v1071
        %v1076 = vmul.f32 %v1066, %v1071
        %v1078 = vlaneseq
        %v1079 = vshrl.u32 %v1078, 7
        %v1080 = vsub.s32 0, %v1079
        %v1081 = vrot.slane %v1030, %v1080
        %v1083 = vadd.f32 %v1073, %v1081
        %v1084 = vadd.f32 %v1074, %v1081
        %v1085 = vadd.f32 %v1075, %v1081
        %v1086 = vadd.f32 %v1076, %v1081
        %v1087 = vmul.f32 %v1083, 0.1
        %v1088 = vmul.f32 %v1084, 0.1
        %v1089 = vmul.f32 %v1085, 0.1
        %v1090 = vmul.f32 %v1086, 0.1
        %v1091 = vmax.f32 %v1083, %v1087
        %v1092 = vmax.f32 %v1084, %v1088
        %v1093 = vmax.f32 %v1085, %v1089
        %v1094 = vmax.f32 %v1086, %v1090
        %v1095 = vadd.f32 %v1091, %v406
        %v1096 = vadd.f32 %v1092, %v407
        %v1097 = vadd.f32 %v1093, %v408
        %v1098 = vadd.f32 %v1094, %v409
        %1099 = vst [vmem:[#allocation8] sm:$0xff] %v1095
        %1100 = vst [vmem:[#allocation8 + $0x8] sm:$0xff] %v1096
        %1101 = vst [vmem:[#allocation8 + $0x10] sm:$0xff] %v1097
        %1102 = vst [vmem:[#allocation8 + $0x18] sm:$0xff] %v1098
        // Predicated region
        $region65: #{tpu_custom_call.1} parent=47 // pred_check
          %p1103 = pneg %p213
        $region66: #{tpu_custom_call.1} parent=47 // pred_check_branch
          %1105 = sbr.rel (%p1103) target = $region68
        $region67: #{tpu_custom_call.1} parent=47 // pred_region
          %s1107 = ssub.s32 512, 512
          %1108 = vsyncadd [#allocation4], %s1107
          %s1109 = sshll.u32 [#allocation8], 4
          %s1110 = int_to_ptr.vmem [resolvable:$true] %s1109
          %1115 = dma.vmem_to_hbm [thread:$0]  %s1110, 512, %s7, [#allocation4], 128, 128, 8
        $region68: #{tpu_custom_call.1} parent=47 // pred_fallthru
          _
        // Predicated region
        $region69: #{tpu_custom_call.1} parent=47 // pred_check
          %p1116 = pneg %p213
        $region70: #{tpu_custom_call.1} parent=47 // pred_check_branch
          %1118 = sbr.rel (%p1116) target = $region72
        $region71: #{tpu_custom_call.1} parent=47 // pred_region
          %1119 = dma.done [#allocation4], 512
        $region72: #{tpu_custom_call.1} parent=47 // pred_fallthru
          _
      $region48: #{tpu_custom_call.1} parent=5 // pred_fallthru
        _
      %p1120 = scmp.le.s32.totalorder 2, %s18
      // Predicated region
      $region73: #{tpu_custom_call.1} parent=5 // pred_check
        %p1121 = pneg %p1120
      $region74: #{tpu_custom_call.1} parent=5 // pred_check_branch
        %1123 = sbr.rel (%p1121) target = $region76
      $region75: #{tpu_custom_call.1} parent=5 // pred_region
        %s1124 = ssub.s32 %s18, 2
      $region76: #{tpu_custom_call.1} parent=5 // pred_fallthru
        _
    $region6: #{tpu_custom_call.1} parent=1 // loop_footer
      %s22 = sadd.s32 1, %s18
    $region7: #{tpu_custom_call.1} parent=1 // loop_footer_branch
      %17 = sbr.rel target = $region3
    $region8: #{tpu_custom_call.1} parent=1 // loop_exit
      _
    %1125 = vsyncpa [#allocation3], 1
    %s1126 = scalar_lea.sflag [#allocation3], 1
    %1127 = vsyncpa %s1126, 1
    %1128 = vsyncpa [#allocation6], 1
    %s1129 = scalar_lea.sflag [#allocation6], 1
    %1130 = vsyncpa %s1129, 1
    %1131 = vsyncpa [#allocation4], 1
    %s1132 = scalar_lea.sflag [#allocation4], 1
    %1133 = vsyncpa %s1132, 1

</llo_original>
